<compile_context>
chip_gen: v5e
topology: v5e:2x2
jax: 0.10.0
libtpu: 0.0.40
codegen_flags: <defaults>
</compile_context>

<pallas_src>
import jax
import jax.numpy as jnp
from jax.experimental import pallas as pl
from jax.experimental.pallas import tpu as pltpu


def _round_up(x, m):
    return (x + m - 1) // m * m


def linear_sub_clamp_kernel(x_ref, w_ref, b_ref, o_ref):
    # y = x @ W_t ; W_t is already (IN_p, OUT_p) and the bias already has the
    # "-7" folded in, so the epilogue is just add + clip + cast.
    y = jnp.dot(x_ref[...], w_ref[...], preferred_element_type=jnp.float32)
    y = y + b_ref[...]                       # (B, OUT_p) + (1, OUT_p)
    o_ref[...] = jnp.clip(y, 0.0, 7.0).astype(o_ref.dtype)


def make_linear_sub_clamp(weight, bias):
    """One-time parameter prep; returns a jitted per-call apply(x)."""
    OUT_F, IN_F = weight.shape
    IN_p = _round_up(IN_F, 128)      # lanes of x / sublane-major K of W_t
    OUT_p = _round_up(OUT_F, 128)    # lanes of W_t / output

    # --- runs exactly once, never on the per-call path ---
    w_t = jnp.zeros((IN_p, OUT_p), weight.dtype).at[:IN_F, :OUT_F].set(weight.T)
    b_p = (jnp.zeros((1, OUT_p), jnp.float32)
           .at[0, :OUT_F].set(bias.astype(jnp.float32)) - 7.0)
    # Padded bias lanes become -7 -> clip(...,0,7)=0 -> sliced off: exact.
    w_t, b_p = jax.block_until_ready((w_t, b_p))

    # NOTE: folding the bias into the matmul (ones column on x, bias row on W_t)
    # would require a per-call concat on x, costing more than the one VPU add it
    # removes -> keep the bias add in-kernel.

    @jax.jit
    def apply(x):
        B, in_f = x.shape
        assert in_f == IN_F
        # Only per-call wrapper op: zero-pad K so x matches W_t's IN_p
        # (zero-padded K contributes 0 to the dot -> exact). Batch is NOT padded.
        x_p = jnp.pad(x, ((0, 0), (0, IN_p - in_f)))

        flops = 2 * B * IN_F * OUT_F                                 # true work
        bytes_accessed = 4 * (B * IN_F + IN_F * OUT_F + OUT_F + B * OUT_F)

        out_p = pl.pallas_call(
            linear_sub_clamp_kernel,
            out_shape=jax.ShapeDtypeStruct((B, OUT_p), x.dtype),
            # Single tile: whole operands resident in VMEM, no grid.
            in_specs=[
                pl.BlockSpec(memory_space=pltpu.MemorySpace.VMEM),
                pl.BlockSpec(memory_space=pltpu.MemorySpace.VMEM),
                pl.BlockSpec(memory_space=pltpu.MemorySpace.VMEM),
            ],
            out_specs=pl.BlockSpec(memory_space=pltpu.MemorySpace.VMEM),
            cost_estimate=pl.CostEstimate(
                flops=flops, transcendentals=0, bytes_accessed=bytes_accessed),
        )(x_p, w_t, b_p)

        # TODO(synk): at production sizes switch to a tiled (M, N, K) grid with a
        # VMEM f32 accumulator: K last + "arbitrary", M/N "parallel" (required to
        # use both TensorCores on v7x); use tn/tk >= 256 with bf16 feeds on
        # v6e/v7x (2x256x256 MXU), keep 128-aligned tiles on v5e (4x128x128);
        # re-derive the VMEM budget against v7x's 64 MiB (BlockSpec
        # double-buffers each input) and set
        # pltpu.CompilerParams(vmem_limit_bytes=...) explicitly.
        # TODO(synk): if this layer runs inside a larger model, fuse it into the
        # surrounding kernel -- custom-call dispatch dominates at (1,8)@(8,4).
        return out_p[:, :OUT_F]

    return apply


if __name__ == "__main__":
    key = jax.random.PRNGKey(0)
    kx, kw, kb = jax.random.split(key, 3)

    # Module: Linear(8, 4, bias=True); input x2: (1, 8)
    IN_F, OUT_F, BATCH = 8, 4, 1
    x2 = jax.random.normal(kx, (BATCH, IN_F), dtype=jnp.float32)
    # PyTorch default Linear init range (Kaiming-uniform-like bound).
    bound = 1.0 / (IN_F ** 0.5)
    weight = jax.random.uniform(kw, (OUT_F, IN_F), minval=-bound, maxval=bound,
                                dtype=jnp.float32)
    bias = jax.random.uniform(kb, (OUT_F,), minval=-bound, maxval=bound,
                              dtype=jnp.float32)

    apply = make_linear_sub_clamp(weight, bias)   # one-time prep (offline)
    out = apply(x2)
    jax.block_until_ready(out)

    # Reference check in plain JAX (original, unfolded formulation).
    ref = jnp.clip(x2 @ weight.T + bias - 7.0, 0.0, 7.0)
    assert out.shape == (BATCH, OUT_F)
    assert jnp.allclose(out, ref, atol=1e-5, rtol=1e-5)
    print("KERNEL_OK")
</pallas_src>

<mosaic_0001>
module attributes {stable_mosaic.version = 11 : i64} {
  func.func @linear_sub_clamp_kernel(%arg0: memref<1x128xf32, #tpu.memory_space<vmem>>, %arg1: memref<128x128xf32, #tpu.memory_space<vmem>>, %arg2: memref<1x128xf32, #tpu.memory_space<vmem>>, %arg3: memref<1x128xf32, #tpu.memory_space<vmem>>) attributes {dimension_semantics = [], scalar_prefetch = 0 : i64, scratch_operands = 0 : i64, tpu.core_type = #tpu.core_type<tc>} {
    %c0 = arith.constant 0 : index
    %c0_0 = arith.constant 0 : index
    %0 = vector.load %arg0[%c0, %c0_0] : memref<1x128xf32, #tpu.memory_space<vmem>>, vector<1x128xf32>
    %c0_1 = arith.constant 0 : index
    %c0_2 = arith.constant 0 : index
    %1 = vector.load %arg1[%c0_1, %c0_2] : memref<128x128xf32, #tpu.memory_space<vmem>>, vector<128x128xf32>
    %cst = arith.constant dense<0.000000e+00> : vector<1x128xf32>
    %2 = tpu.matmul %0, %1, %cst {dimension_numbers = #tpu.dot_dimension_numbers<[1], [0], [0], [1], [0, 0, 1, 1], [], []>} : vector<1x128xf32>, vector<128x128xf32>, vector<1x128xf32> -> vector<1x128xf32>
    %c0_3 = arith.constant 0 : index
    %c0_4 = arith.constant 0 : index
    %3 = vector.load %arg2[%c0_3, %c0_4] : memref<1x128xf32, #tpu.memory_space<vmem>>, vector<1x128xf32>
    %4 = arith.addf %2, %3 : vector<1x128xf32>
    %cst_5 = arith.constant 0.000000e+00 : f32
    %cst_6 = arith.constant 7.000000e+00 : f32
    %5 = vector.broadcast %cst_5 : f32 to vector<1x128xf32>
    %6 = arith.maximumf %5, %4 : vector<1x128xf32>
    %7 = vector.broadcast %cst_6 : f32 to vector<1x128xf32>
    %8 = arith.minimumf %7, %6 : vector<1x128xf32>
    %c0_7 = arith.constant 0 : index
    %c0_8 = arith.constant 0 : index
    %9 = vector.load %arg3[%c0_7, %c0_8] : memref<1x128xf32, #tpu.memory_space<vmem>>, vector<1x128xf32>
    tpu.vector_store %arg3[%c0_7, %c0_8], %8 {strides = array<i32>} : memref<1x128xf32, #tpu.memory_space<vmem>>, vector<1x128xf32>,
    return
  }
}

</mosaic_0001>

<llo_original>
// kernel: apply.1
$region0: #{apply.1}
  #allocation0 [shape = 'u32[]', space=smem, size = 0x4, offset = 0x4, fixed_abs, tag = 'smem constant byte address 0x4 - core index']
  #allocation1 [shape = 'u32[72,128]{1,0:T(1,128)}', space=vmem, size = 0x9000, scoped, tag = 'internal scratch']
  %s0 = inlined_call_operand.vmem [shape: f32[1,128], index: 0, kind: input, shape index: {}]
  %s1 = inlined_call_operand.hbm [shape: f32[128,128], index: 1, kind: input, shape index: {}]
  %s2 = inlined_call_operand.vmem [shape: f32[1,128], index: 2, kind: input, shape index: {}]
  %s3 = inlined_call_operand.hbm [shape: f32[1,128], index: 3, kind: output, shape index: {}]
  %s4 = sld [smem:[#allocation0]]
  $region26: #{apply.1} parent=0
    _
  %s6 = ssub.s32 1, %s4
  %s7 = scalar_select 0, %s6, %s4
  $region1: #{apply.1} parent=0
    #allocation2 [shape = 'u8[65536]{0}', space=vmem, size = 0x10000, scoped, tag = 'input window, operand 1, single buffered']
    #allocation3 [shape = 's32[1]{0}', space=sflag, size = 0x4, scoped, tag = 'scoped memory for apply.1']
    #allocation4 [shape = 's32[1]{0}', space=sflag, size = 0x4, scoped, tag = 'scoped memory for apply.1']
    #allocation5 [shape = 'u8[512]{0}', space=vmem, size = 0x400, scoped, tag = 'output window, operand 0, single buffered']
    %8 = vsyncpa [#allocation3], 0
    %9 = vsyncpa [#allocation4], 0
    // Predicated region
    $region2: #{apply.1} parent=1 // pred_check
      _
    $region3: #{apply.1} parent=1 // pred_check_branch
      %11 = sbr.rel (0) target = $region5
    $region4: #{apply.1} parent=1 // pred_region
      _
    $region5: #{apply.1} parent=1 // pred_fallthru
      _
    // Predicated region
    $region6: #{apply.1} parent=1 // pred_check
      _
    $region7: #{apply.1} parent=1 // pred_check_branch
      %13 = sbr.rel (0) target = $region9
    $region8: #{apply.1} parent=1 // pred_region
      %15 = vsyncadd [#allocation3], 0
      %s16 = sshll.u32 %s1, 4
      %s17 = int_to_ptr.hbm [resolvable:$true] %s16
      %s18 = sshll.u32 [#allocation2], 4
      %s19 = int_to_ptr.vmem [resolvable:$true] %s18
      %24 = dma.hbm_to_vmem [thread:$0]  %s17, 2048, %s19, [#allocation3], 128, 128, 8
    $region9: #{apply.1} parent=1 // pred_fallthru
      _
    // Predicated region
    $region10: #{apply.1} parent=1 // pred_check
      _
    $region11: #{apply.1} parent=1 // pred_check_branch
      %26 = sbr.rel (0) target = $region13
    $region12: #{apply.1} parent=1 // pred_region
      _
    $region13: #{apply.1} parent=1 // pred_fallthru
      _
    // Predicated region
    $region14: #{apply.1} parent=1 // pred_check
      _
    $region15: #{apply.1} parent=1 // pred_check_branch
      %28 = sbr.rel (0) target = $region17
    $region16: #{apply.1} parent=1 // pred_region
      %30 = dma.done [#allocation3], 2048
    $region17: #{apply.1} parent=1 // pred_fallthru
      _
    %v31 = vld [vmem:[%s0] sm:$0x1]
    %v32 = vld [vmem:[#allocation2] sm:$0xff]
    %v33 = vld [vmem:[#allocation2 + $0x8] sm:$0xff]
    %v34 = vld [vmem:[#allocation2 + $0x10] sm:$0xff]
    %v35 = vld [vmem:[#allocation2 + $0x18] sm:$0xff]
    %v36 = vld [vmem:[#allocation2 + $0x20] sm:$0xff]
    %v37 = vld [vmem:[#allocation2 + $0x28] sm:$0xff]
    %v38 = vld [vmem:[#allocation2 + $0x30] sm:$0xff]
    %v39 = vld [vmem:[#allocation2 + $0x38] sm:$0xff]
    %v40 = vld [vmem:[#allocation2 + $0x40] sm:$0xff]
    %v41 = vld [vmem:[#allocation2 + $0x48] sm:$0xff]
    %v42 = vld [vmem:[#allocation2 + $0x50] sm:$0xff]
    %v43 = vld [vmem:[#allocation2 + $0x58] sm:$0xff]
    %v44 = vld [vmem:[#allocation2 + $0x60] sm:$0xff]
    %v45 = vld [vmem:[#allocation2 + $0x68] sm:$0xff]
    %v46 = vld [vmem:[#allocation2 + $0x70] sm:$0xff]
    %v47 = vld [vmem:[#allocation2 + $0x78] sm:$0xff]
    %v48 = vld [vmem:[%s2] sm:$0x1]
    %49 = vmatpush.msra.mxu0 %v47
    %50 = vmatpush.msra.mxu0 %v46
    %51 = vmatpush.msra.mxu0 %v45
    %52 = vmatpush.msra.mxu0 %v44
    %53 = vmatpush.msra.mxu0 %v43
    %54 = vmatpush.msra.mxu0 %v42
    %55 = vmatpush.msra.mxu0 %v41
    %56 = vmatpush.msra.mxu0 %v40
    %57 = vmatpush.msra.mxu0 %v39
    %58 = vmatpush.msra.mxu0 %v38
    %59 = vmatpush.msra.mxu0 %v37
    %60 = vmatpush.msra.mxu0 %v36
    %61 = vmatpush.msra.mxu0 %v35
    %62 = vmatpush.msra.mxu0 %v34
    %63 = vmatpush.msra.mxu0 %v33
    %64 = vmatpush.msra.mxu0 %v32
    %65 = vmatmul.f32.gmra.mxu0 %v31
    %v66 = vpop.f32.mrf.mxu0
    %v67 = vadd.f32 %v48, %v66
    %68 = vdwg.mxu0
    %v69 = vmax.f32 %v67, 0.0
    %v70 = vmin.f32 %v69, 7.0
    %71 = vst [vmem:[#allocation5] sm:$0x1] %v70
    // Predicated region
    $region18: #{apply.1} parent=1 // pred_check
      _
    $region19: #{apply.1} parent=1 // pred_check_branch
      %73 = sbr.rel (0) target = $region21
    $region20: #{apply.1} parent=1 // pred_region
      %75 = vsyncadd [#allocation4], 0
      %s77 = sshll.u32 [#allocation5], 4
      %s78 = int_to_ptr.vmem [resolvable:$true] %s77
      %s79 = sshll.u32 %s3, 4
      %s80 = int_to_ptr.hbm [resolvable:$true] %s79
      %82 = dma.vmem_to_hbm [thread:$0]  %s78, 16, %s80, [#allocation4]
    $region21: #{apply.1} parent=1 // pred_fallthru
      _
    // Predicated region
    $region22: #{apply.1} parent=1 // pred_check
      _
    $region23: #{apply.1} parent=1 // pred_check_branch
      %84 = sbr.rel (0) target = $region25
    $region24: #{apply.1} parent=1 // pred_region
      %86 = dma.done [#allocation4], 16
    $region25: #{apply.1} parent=1 // pred_fallthru
      _
    %87 = vsyncpa [#allocation3], 1
    %88 = vsyncpa [#allocation4], 1

</llo_original>
